<compile_context>
chip_gen: v5e
topology: v5e:2x2
jax: 0.10.0
libtpu: 0.0.40
codegen_flags: <defaults>
</compile_context>

<pallas_src>
import functools
import math

import jax
import jax.numpy as jnp
from jax.experimental import pallas as pl
from jax.experimental.pallas import tpu as pltpu

LN_EPS = 1e-5


def _round_up(a, b):
    return ((a + b - 1) // b) * b


def cell_kernel(x_ref, bias_ref, w_ref, gamma_ref, beta_ref, y_ref, *, matmul_dtype):
    # x_ref:      (1, TM, in_sz)   current (batch, time-tile) slab
    # bias_ref:   (1, 1, out_sz)   per-batch bias = h0 @ W_mem + b_mem + b_in (f32)
    # w_ref:      (in_sz, out_sz)  input projection (bf16 or f32)
    # gamma/beta: (1, out_sz)      LayerNorm affine (f32)
    x = x_ref[0]                                           # (TM, in_sz)
    if matmul_dtype is not None and x.dtype != matmul_dtype:
        x = x.astype(matmul_dtype)                         # in-kernel cast, no HBM pass

    # MXU matmul with f32 accumulation; per-batch bias folded in as one add.
    z = jnp.dot(x, w_ref[...], preferred_element_type=jnp.float32)
    z = z + bias_ref[0]                                    # (TM, out_sz), f32

    # LayerNorm over the true feature dim (no padded lanes -> no mask needed).
    inv_n = 1.0 / z.shape[-1]
    mean = jnp.sum(z, axis=-1, keepdims=True) * inv_n
    centered = z - mean
    var = jnp.sum(centered * centered, axis=-1, keepdims=True) * inv_n
    norm = centered * jax.lax.rsqrt(var + LN_EPS)

    # f32 tanh on the EUP (bf16 EUP math would help v6e/v7x only if EUP-bound).
    y = jnp.tanh(norm * gamma_ref[...] + beta_ref[...])    # (TM, out_sz), f32
    y_ref[0] = y.astype(y_ref.dtype)


def _build_cell_call(B, T, in_sz, out_sz, TM, n_t, out_dtype, matmul_dtype,
                     vmem_limit, single_buffer_consts):
    const_kw = {"pipeline_mode": pl.Buffered(1)} if single_buffer_consts else {}
    kernel = functools.partial(cell_kernel, matmul_dtype=matmul_dtype)
    return pl.pallas_call(
        kernel,
        out_shape=jax.ShapeDtypeStruct((B, T, out_sz), out_dtype),
        grid_spec=pltpu.PrefetchScalarGridSpec(
            num_scalar_prefetch=0,
            grid=(B, n_t),
            in_specs=[
                pl.BlockSpec((1, TM, in_sz), lambda b, t: (b, t, 0)),            # x
                pl.BlockSpec((1, 1, out_sz), lambda b, t: (b, 0, 0)),            # bias
                pl.BlockSpec((in_sz, out_sz), lambda b, t: (0, 0), **const_kw),  # w_in
                pl.BlockSpec((1, out_sz), lambda b, t: (0, 0), **const_kw),      # gamma
                pl.BlockSpec((1, out_sz), lambda b, t: (0, 0), **const_kw),      # beta
            ],
            out_specs=pl.BlockSpec((1, TM, out_sz), lambda b, t: (b, t, 0)),     # y
        ),
        compiler_params=pltpu.CompilerParams(
            dimension_semantics=("parallel", "parallel"),
            vmem_limit_bytes=vmem_limit),
    )


def cell_forward(x, h0, w_in, b_in, w_mem, b_mem, gamma, beta,
                 *, matmul_dtype=jnp.bfloat16, out_dtype=None,
                 time_tile_bytes=2 * 1024 * 1024):
    """x: (B, T, in_sz), h0: (1, B, out_sz). Returns (y, hn).

    matmul_dtype: dtype of the MXU inputs (bf16 default; None -> f32 inputs).
    out_dtype:    dtype of y / hn written to HBM (default: x.dtype). Pass
                  bf16 to halve output HBM traffic if downstream tolerates it.
    """
    B, T, in_sz = x.shape
    out_sz = w_in.shape[1]
    out_dtype = x.dtype if out_dtype is None else out_dtype

    # --- Hidden-state projection hoisted out of the kernel (one small matmul).
    h0_2d = h0.reshape(B, out_sz).astype(jnp.float32)
    bias_b = (h0_2d @ w_mem.astype(jnp.float32) + b_mem + b_in).astype(jnp.float32)
    bias_3d = bias_b.reshape(B, 1, out_sz)                       # (B, 1, out_sz)

    gamma_2d = gamma.reshape(1, out_sz).astype(jnp.float32)
    beta_2d = beta.reshape(1, out_sz).astype(jnp.float32)

    # Weight cast once in the wrapper (tiny, one-time); x is cast in-kernel.
    w_k = w_in if matmul_dtype is None else w_in.astype(matmul_dtype)

    # --- Adaptive time tile: target ~time_tile_bytes per tile, clamp [256,1024],
    #     shrink until the per-step footprint fits a 40 MiB budget (headroom on
    #     v7x's 64 MiB physical VMEM; plenty of slack on v5e/v6e's 128 MiB).
    x_b = jnp.dtype(x.dtype).itemsize
    y_b = jnp.dtype(out_dtype).itemsize
    w_bytes = in_sz * out_sz * jnp.dtype(w_k.dtype).itemsize     # single-buffered
    row_bytes = in_sz * x_b + out_sz * y_b

    def tile_bytes(tm):
        # x / y slabs double-buffered + f32 in-body temporaries headroom.
        return 2 * tm * in_sz * x_b + 2 * tm * out_sz * y_b + 3 * tm * out_sz * 4

    tm_cap = max(256, min(1024, _round_up(max(time_tile_bytes // max(row_bytes, 1), 8), 8)))
    budget = 40 * 1024 * 1024
    while tm_cap > 8 and w_bytes + tile_bytes(tm_cap) > budget:
        tm_cap = max(8, (tm_cap // 2) // 8 * 8)
    # TODO(synk): add a K-tiled (in_sz) variant with an f32 VMEM accumulator and
    # pl.when(k == last) LN/tanh for shapes where w_in alone exceeds the budget
    # (e.g. 4096x4096 f32 on v7x).

    if T <= tm_cap:
        TM, n_t = T, 1                 # block == full time dim (always legal)
    else:
        TM, n_t = tm_cap, pl.cdiv(T, tm_cap)   # TM multiple of 8; ragged last tile masked

    vmem_limit = int(min(48 * 1024 * 1024,
                         max(32 * 1024 * 1024, 1.5 * (w_bytes + tile_bytes(TM)))))

    args = (x, bias_3d, w_k, gamma_2d, beta_2d)
    try:
        y = _build_cell_call(B, T, in_sz, out_sz, TM, n_t, out_dtype, matmul_dtype,
                             vmem_limit, single_buffer_consts=True)(*args)
    except Exception:  # pragma: no cover — JAX build without Buffered(1) support
        y = _build_cell_call(B, T, in_sz, out_sz, TM, n_t, out_dtype, matmul_dtype,
                             vmem_limit, single_buffer_consts=False)(*args)

    hn = y[:, T - 1, :][None]          # (1, B, out_sz) — cheap wrapper slice
    return y, hn


def reference_forward(x, h0, w_in, b_in, w_mem, b_mem, gamma, beta):
    """Pure-JAX reference mirroring the PyTorch module."""
    B = x.shape[0]
    out_sz = w_in.shape[1]
    h0_r = h0.reshape(B, 1, out_sz)
    wx = x @ w_in + b_in
    wh = h0_r @ w_mem + b_mem
    z = wx + wh
    mean = jnp.mean(z, axis=-1, keepdims=True)
    var = jnp.mean((z - mean) ** 2, axis=-1, keepdims=True)
    out_ln = (z - mean) / jnp.sqrt(var + LN_EPS) * gamma + beta
    y = jnp.tanh(out_ln)
    hn = y[:, -1, :][None]
    return y, hn


if __name__ == "__main__":
    B, T, in_sz, out_sz = 2, 8, 32, 32

    key = jax.random.PRNGKey(0)
    kx, kh, kw1, kb1, kw2, kb2 = jax.random.split(key, 6)

    # Inputs
    x = jax.random.normal(kx, (B, T, in_sz), dtype=jnp.float32)
    h0 = jax.random.normal(kh, (1, B, out_sz), dtype=jnp.float32)

    # Deterministic parameter init (torch-Linear-like uniform scale), weights
    # stored pre-transposed as (in, out).
    lim_in = 1.0 / math.sqrt(in_sz)
    lim_out = 1.0 / math.sqrt(out_sz)
    w_in = jax.random.uniform(kw1, (in_sz, out_sz), jnp.float32, -lim_in, lim_in)
    b_in = jax.random.uniform(kb1, (out_sz,), jnp.float32, -lim_in, lim_in)
    w_mem = jax.random.uniform(kw2, (out_sz, out_sz), jnp.float32, -lim_out, lim_out)
    b_mem = jax.random.uniform(kb2, (out_sz,), jnp.float32, -lim_out, lim_out)
    gamma = jnp.ones((out_sz,), jnp.float32)   # LayerNorm weight
    beta = jnp.zeros((out_sz,), jnp.float32)   # LayerNorm bias

    y_ref, hn_ref = reference_forward(x, h0, w_in, b_in, w_mem, b_mem, gamma, beta)

    # Default path: bf16 MXU inputs, f32 accumulation / LayerNorm / tanh.
    y, hn = cell_forward(x, h0, w_in, b_in, w_mem, b_mem, gamma, beta)
    jax.block_until_ready(y)
    jax.block_until_ready(hn)
    assert y.shape == (B, T, out_sz)
    assert hn.shape == (1, B, out_sz)
    assert jnp.max(jnp.abs(y - y_ref)) < 5e-2      # bf16 matmul tolerance
    assert jnp.max(jnp.abs(hn - hn_ref)) < 5e-2

    # Exact f32 MXU path matches the f32 module tightly.
    y32, hn32 = cell_forward(x, h0, w_in, b_in, w_mem, b_mem, gamma, beta,
                             matmul_dtype=None)
    jax.block_until_ready(y32)
    jax.block_until_ready(hn32)
    assert jnp.max(jnp.abs(y32 - y_ref)) < 1e-5
    assert jnp.max(jnp.abs(hn32 - hn_ref)) < 1e-5

    print("KERNEL_OK")
</pallas_src>

<mosaic_0001>
module attributes {stable_mosaic.version = 11 : i64} {
  func.func @cell_kernel(%arg0: i32, %arg1: i32, %arg2: memref<1x8x32xf32, #tpu.memory_space<vmem>>, %arg3: memref<1x1x32xf32, #tpu.memory_space<vmem>>, %arg4: memref<32x32xbf16, #tpu.memory_space<vmem>>, %arg5: memref<1x32xf32, #tpu.memory_space<vmem>>, %arg6: memref<1x32xf32, #tpu.memory_space<vmem>>, %arg7: memref<1x8x32xf32, #tpu.memory_space<vmem>>) attributes {dimension_semantics = [#tpu.dimension_semantics<parallel>, #tpu.dimension_semantics<parallel>], iteration_bounds = array<i64: 2, 1>, scalar_prefetch = 0 : i64, scratch_operands = 0 : i64, tpu.core_type = #tpu.core_type<tc>, window_params = [{transform_indices = @transform_0, window_bounds = array<i64: 1, 8, 32>}, {transform_indices = @transform_1, window_bounds = array<i64: 1, 1, 32>}, {pipeline_mode = #tpu.pipeline_mode<synchronous>, transform_indices = @transform_2, window_bounds = array<i64: 32, 32>}, {pipeline_mode = #tpu.pipeline_mode<synchronous>, transform_indices = @transform_3, window_bounds = array<i64: 1, 32>}, {pipeline_mode = #tpu.pipeline_mode<synchronous>, transform_indices = @transform_4, window_bounds = array<i64: 1, 32>}, {transform_indices = @transform_5, window_bounds = array<i64: 1, 8, 32>}]} {
    %c0 = arith.constant 0 : index
    %c0_0 = arith.constant 0 : index
    %c0_1 = arith.constant 0 : index
    %0 = vector.load %arg2[%c0, %c0_0, %c0_1] : memref<1x8x32xf32, #tpu.memory_space<vmem>>, vector<1x8x32xf32>
    %1 = vector.shape_cast %0 : vector<1x8x32xf32> to vector<8x32xf32>
    %2 = arith.truncf %1 : vector<8x32xf32> to vector<8x32xbf16>
    %c0_2 = arith.constant 0 : index
    %c0_3 = arith.constant 0 : index
    %3 = vector.load %arg4[%c0_2, %c0_3] : memref<32x32xbf16, #tpu.memory_space<vmem>>, vector<32x32xbf16>
    %cst = arith.constant dense<0.000000e+00> : vector<8x32xf32>
    %4 = tpu.matmul %2, %3, %cst {dimension_numbers = #tpu.dot_dimension_numbers<[1], [0], [0], [1], [0, 0, 1, 1], [], []>} : vector<8x32xbf16>, vector<32x32xbf16>, vector<8x32xf32> -> vector<8x32xf32>
    %c0_4 = arith.constant 0 : index
    %c0_5 = arith.constant 0 : index
    %c0_6 = arith.constant 0 : index
    %5 = vector.load %arg3[%c0_4, %c0_5, %c0_6] : memref<1x1x32xf32, #tpu.memory_space<vmem>>, vector<1x1x32xf32>
    %6 = vector.shape_cast %5 : vector<1x1x32xf32> to vector<1x32xf32>
    %7 = vector.broadcast %6 : vector<1x32xf32> to vector<8x32xf32>
    %8 = arith.addf %4, %7 : vector<8x32xf32>
    %cst_7 = arith.constant dense<0.000000e+00> : vector<8xf32>
    %9 = vector.multi_reduction <add>, %8, %cst_7 [1] : vector<8x32xf32> to vector<8xf32>
    %10 = vector.shape_cast %9 : vector<8xf32> to vector<8x1xf32>
    %cst_8 = arith.constant 3.125000e-02 : f32
    %11 = vector.broadcast %cst_8 : f32 to vector<8x1xf32>
    %12 = arith.mulf %10, %11 : vector<8x1xf32>
    %13 = vector.broadcast %12 : vector<8x1xf32> to vector<8x32xf32>
    %14 = arith.subf %8, %13 : vector<8x32xf32>
    %15 = arith.mulf %14, %14 : vector<8x32xf32>
    %cst_9 = arith.constant dense<0.000000e+00> : vector<8xf32>
    %16 = vector.multi_reduction <add>, %15, %cst_9 [1] : vector<8x32xf32> to vector<8xf32>
    %17 = vector.shape_cast %16 : vector<8xf32> to vector<8x1xf32>
    %cst_10 = arith.constant 3.125000e-02 : f32
    %18 = vector.broadcast %cst_10 : f32 to vector<8x1xf32>
    %19 = arith.mulf %17, %18 : vector<8x1xf32>
    %cst_11 = arith.constant 9.99999974E-6 : f32
    %20 = vector.broadcast %cst_11 : f32 to vector<8x1xf32>
    %21 = arith.addf %19, %20 : vector<8x1xf32>
    %22 = math.rsqrt %21 : vector<8x1xf32>
    %23 = vector.broadcast %22 : vector<8x1xf32> to vector<8x32xf32>
    %24 = arith.mulf %14, %23 : vector<8x32xf32>
    %c0_12 = arith.constant 0 : index
    %c0_13 = arith.constant 0 : index
    %25 = vector.load %arg5[%c0_12, %c0_13] : memref<1x32xf32, #tpu.memory_space<vmem>>, vector<1x32xf32>
    %26 = vector.broadcast %25 : vector<1x32xf32> to vector<8x32xf32>
    %27 = arith.mulf %24, %26 : vector<8x32xf32>
    %c0_14 = arith.constant 0 : index
    %c0_15 = arith.constant 0 : index
    %28 = vector.load %arg6[%c0_14, %c0_15] : memref<1x32xf32, #tpu.memory_space<vmem>>, vector<1x32xf32>
    %29 = vector.broadcast %28 : vector<1x32xf32> to vector<8x32xf32>
    %30 = arith.addf %27, %29 : vector<8x32xf32>
    %31 = math.tanh %30 : vector<8x32xf32>
    %c0_16 = arith.constant 0 : index
    %c0_17 = arith.constant 0 : index
    %c0_18 = arith.constant 0 : index
    %32 = vector.load %arg7[%c0_16, %c0_17, %c0_18] : memref<1x8x32xf32, #tpu.memory_space<vmem>>, vector<1x8x32xf32>
    %33 = vector.shape_cast %32 : vector<1x8x32xf32> to vector<8x32xf32>
    %34 = vector.shape_cast %31 : vector<8x32xf32> to vector<1x8x32xf32>
    tpu.vector_store %arg7[%c0_16, %c0_17, %c0_18], %34 {strides = array<i32>} : memref<1x8x32xf32, #tpu.memory_space<vmem>>, vector<1x8x32xf32>,
    return
  }
  func.func @transform_0(%arg0: i32, %arg1: i32) -> (i32, i32, i32) {
    %c0_i32 = arith.constant 0 : i32
    %c0_i32_0 = arith.constant 0 : i32
    return %arg0, %arg1, %c0_i32 : i32, i32, i32
  }
  func.func @transform_1(%arg0: i32, %arg1: i32) -> (i32, i32, i32) {
    %c0_i32 = arith.constant 0 : i32
    %c0_i32_0 = arith.constant 0 : i32
    %c0_i32_1 = arith.constant 0 : i32
    return %arg0, %c0_i32, %c0_i32_0 : i32, i32, i32
  }
  func.func @transform_2(%arg0: i32, %arg1: i32) -> (i32, i32) {
    %c0_i32 = arith.constant 0 : i32
    %c0_i32_0 = arith.constant 0 : i32
    %c0_i32_1 = arith.constant 0 : i32
    return %c0_i32, %c0_i32_0 : i32, i32
  }
  func.func @transform_3(%arg0: i32, %arg1: i32) -> (i32, i32) {
    %c0_i32 = arith.constant 0 : i32
    %c0_i32_0 = arith.constant 0 : i32
    %c0_i32_1 = arith.constant 0 : i32
    return %c0_i32, %c0_i32_0 : i32, i32
  }
  func.func @transform_4(%arg0: i32, %arg1: i32) -> (i32, i32) {
    %c0_i32 = arith.constant 0 : i32
    %c0_i32_0 = arith.constant 0 : i32
    %c0_i32_1 = arith.constant 0 : i32
    return %c0_i32, %c0_i32_0 : i32, i32
  }
  func.func @transform_5(%arg0: i32, %arg1: i32) -> (i32, i32, i32) {
    %c0_i32 = arith.constant 0 : i32
    %c0_i32_0 = arith.constant 0 : i32
    return %arg0, %arg1, %c0_i32 : i32, i32, i32
  }
}

module attributes {stable_mosaic.version = 11 : i64} {
  func.func @cell_kernel(%arg0: i32, %arg1: i32, %arg2: memref<1x8x32xf32, #tpu.memory_space<vmem>>, %arg3: memref<1x1x32xf32, #tpu.memory_space<vmem>>, %arg4: memref<32x32xbf16, #tpu.memory_space<vmem>>, %arg5: memref<1x32xf32, #tpu.memory_space<vmem>>, %arg6: memref<1x32xf32, #tpu.memory_space<vmem>>, %arg7: memref<1x8x32xf32, #tpu.memory_space<vmem>>) attributes {dimension_semantics = [#tpu.dimension_semantics<parallel>, #tpu.dimension_semantics<parallel>], iteration_bounds = array<i64: 2, 1>, scalar_prefetch = 0 : i64, scratch_operands = 0 : i64, tpu.core_type = #tpu.core_type<tc>, window_params = [{transform_indices = @transform_0, window_bounds = array<i64: 1, 8, 32>}, {transform_indices = @transform_1, window_bounds = array<i64: 1, 1, 32>}, {pipeline_mode = #tpu.pipeline_mode<synchronous>, transform_indices = @transform_2, window_bounds = array<i64: 32, 32>}, {pipeline_mode = #tpu.pipeline_mode<synchronous>, transform_indices = @transform_3, window_bounds = array<i64: 1, 32>}, {pipeline_mode = #tpu.pipeline_mode<synchronous>, transform_indices = @transform_4, window_bounds = array<i64: 1, 32>}, {transform_indices = @transform_5, window_bounds = array<i64: 1, 8, 32>}]} {
    %c0 = arith.constant 0 : index
    %c0_0 = arith.constant 0 : index
    %c0_1 = arith.constant 0 : index
    %0 = vector.load %arg2[%c0, %c0_0, %c0_1] : memref<1x8x32xf32, #tpu.memory_space<vmem>>, vector<1x8x32xf32>
    %1 = vector.shape_cast %0 : vector<1x8x32xf32> to vector<8x32xf32>
    %2 = arith.truncf %1 : vector<8x32xf32> to vector<8x32xbf16>
    %c0_2 = arith.constant 0 : index
    %c0_3 = arith.constant 0 : index
    %3 = vector.load %arg4[%c0_2, %c0_3] : memref<32x32xbf16, #tpu.memory_space<vmem>>, vector<32x32xbf16>
    %cst = arith.constant dense<0.000000e+00> : vector<8x32xf32>
    %4 = tpu.matmul %2, %3, %cst {dimension_numbers = #tpu.dot_dimension_numbers<[1], [0], [0], [1], [0, 0, 1, 1], [], []>} : vector<8x32xbf16>, vector<32x32xbf16>, vector<8x32xf32> -> vector<8x32xf32>
    %c0_4 = arith.constant 0 : index
    %c0_5 = arith.constant 0 : index
    %c0_6 = arith.constant 0 : index
    %5 = vector.load %arg3[%c0_4, %c0_5, %c0_6] : memref<1x1x32xf32, #tpu.memory_space<vmem>>, vector<1x1x32xf32>
    %6 = vector.shape_cast %5 : vector<1x1x32xf32> to vector<1x32xf32>
    %7 = vector.broadcast %6 : vector<1x32xf32> to vector<8x32xf32>
    %8 = arith.addf %4, %7 : vector<8x32xf32>
    %cst_7 = arith.constant dense<0.000000e+00> : vector<8xf32>
    %9 = vector.multi_reduction <add>, %8, %cst_7 [1] : vector<8x32xf32> to vector<8xf32>
    %10 = vector.shape_cast %9 : vector<8xf32> to vector<8x1xf32>
    %cst_8 = arith.constant 3.125000e-02 : f32
    %11 = vector.broadcast %cst_8 : f32 to vector<8x1xf32>
    %12 = arith.mulf %10, %11 : vector<8x1xf32>
    %13 = vector.broadcast %12 : vector<8x1xf32> to vector<8x32xf32>
    %14 = arith.subf %8, %13 : vector<8x32xf32>
    %15 = arith.mulf %14, %14 : vector<8x32xf32>
    %cst_9 = arith.constant dense<0.000000e+00> : vector<8xf32>
    %16 = vector.multi_reduction <add>, %15, %cst_9 [1] : vector<8x32xf32> to vector<8xf32>
    %17 = vector.shape_cast %16 : vector<8xf32> to vector<8x1xf32>
    %cst_10 = arith.constant 3.125000e-02 : f32
    %18 = vector.broadcast %cst_10 : f32 to vector<8x1xf32>
    %19 = arith.mulf %17, %18 : vector<8x1xf32>
    %cst_11 = arith.constant 9.99999974E-6 : f32
    %20 = vector.broadcast %cst_11 : f32 to vector<8x1xf32>
    %21 = arith.addf %19, %20 : vector<8x1xf32>
    %22 = math.rsqrt %21 : vector<8x1xf32>
    %23 = vector.broadcast %22 : vector<8x1xf32> to vector<8x32xf32>
    %24 = arith.mulf %14, %23 : vector<8x32xf32>
    %c0_12 = arith.constant 0 : index
    %c0_13 = arith.constant 0 : index
    %25 = vector.load %arg5[%c0_12, %c0_13] : memref<1x32xf32, #tpu.memory_space<vmem>>, vector<1x32xf32>
    %26 = vector.broadcast %25 : vector<1x32xf32> to vector<8x32xf32>
    %27 = arith.mulf %24, %26 : vector<8x32xf32>
    %c0_14 = arith.constant 0 : index
    %c0_15 = arith.constant 0 : index
    %28 = vector.load %arg6[%c0_14, %c0_15] : memref<1x32xf32, #tpu.memory_space<vmem>>, vector<1x32xf32>
    %29 = vector.broadcast %28 : vector<1x32xf32> to vector<8x32xf32>
    %30 = arith.addf %27, %29 : vector<8x32xf32>
    %31 = math.tanh %30 : vector<8x32xf32>
    %c0_16 = arith.constant 0 : index
    %c0_17 = arith.constant 0 : index
    %c0_18 = arith.constant 0 : index
    %32 = vector.load %arg7[%c0_16, %c0_17, %c0_18] : memref<1x8x32xf32, #tpu.memory_space<vmem>>, vector<1x8x32xf32>
    %33 = vector.shape_cast %32 : vector<1x8x32xf32> to vector<8x32xf32>
    %34 = vector.shape_cast %31 : vector<8x32xf32> to vector<1x8x32xf32>
    tpu.vector_store %arg7[%c0_16, %c0_17, %c0_18], %34 {strides = array<i32>} : memref<1x8x32xf32, #tpu.memory_space<vmem>>, vector<1x8x32xf32>,
    return
  }
  func.func @transform_0(%arg0: i32, %arg1: i32) -> (i32, i32, i32) {
    %c0_i32 = arith.constant 0 : i32
    %c0_i32_0 = arith.constant 0 : i32
    return %arg0, %arg1, %c0_i32 : i32, i32, i32
  }
  func.func @transform_1(%arg0: i32, %arg1: i32) -> (i32, i32, i32) {
    %c0_i32 = arith.constant 0 : i32
    %c0_i32_0 = arith.constant 0 : i32
    %c0_i32_1 = arith.constant 0 : i32
    return %arg0, %c0_i32, %c0_i32_0 : i32, i32, i32
  }
  func.func @transform_2(%arg0: i32, %arg1: i32) -> (i32, i32) {
    %c0_i32 = arith.constant 0 : i32
    %c0_i32_0 = arith.constant 0 : i32
    %c0_i32_1 = arith.constant 0 : i32
    return %c0_i32, %c0_i32_0 : i32, i32
  }
  func.func @transform_3(%arg0: i32, %arg1: i32) -> (i32, i32) {
    %c0_i32 = arith.constant 0 : i32
    %c0_i32_0 = arith.constant 0 : i32
    %c0_i32_1 = arith.constant 0 : i32
    return %c0_i32, %c0_i32_0 : i32, i32
  }
  func.func @transform_4(%arg0: i32, %arg1: i32) -> (i32, i32) {
    %c0_i32 = arith.constant 0 : i32
    %c0_i32_0 = arith.constant 0 : i32
    %c0_i32_1 = arith.constant 0 : i32
    return %c0_i32, %c0_i32_0 : i32, i32
  }
  func.func @transform_5(%arg0: i32, %arg1: i32) -> (i32, i32, i32) {
    %c0_i32 = arith.constant 0 : i32
    %c0_i32_0 = arith.constant 0 : i32
    return %arg0, %arg1, %c0_i32 : i32, i32, i32
  }
}

</mosaic_0001>

<llo_original>
// kernel: tpu_custom_call.1
$region0: #{tpu_custom_call.1}
  #allocation0 [shape = 'u32[]', space=smem, size = 0x4, offset = 0x4, fixed_abs, tag = 'smem constant byte address 0x4 - core index']
  #allocation1 [shape = 'u32[72,128]{1,0:T(1,128)}', space=vmem, size = 0x9000, scoped, tag = 'internal scratch']
  %s0 = inlined_call_operand.hbm [shape: f32[2,8,32], index: 0, kind: input, shape index: {}]
  %s1 = inlined_call_operand.hbm [shape: f32[2,1,32], index: 1, kind: input, shape index: {}]
  %s2 = inlined_call_operand.hbm [shape: bf16[32,32], index: 2, kind: input, shape index: {}]
  %s3 = inlined_call_operand.vmem [shape: f32[1,32], index: 3, kind: input, shape index: {}]
  %s4 = inlined_call_operand.vmem [shape: f32[1,32], index: 4, kind: input, shape index: {}]
  %s5 = inlined_call_operand.hbm [shape: f32[2,8,32], index: 5, kind: output, shape index: {}]
  %s6 = sld [smem:[#allocation0]]
  $region65: #{tpu_custom_call.1} parent=0
    _
  %s8 = ssub.s32 1, %s6
  %s9 = scalar_select 0, %s8, %s6
  $region1: #{tpu_custom_call.1} parent=0
    #allocation2 [shape = 'u8[8192]{0}', space=vmem, size = 0x2000, scoped, tag = 'input window, operand 0']
    #allocation3 [shape = 's32[2]{0}', space=sflag, size = 0x8, scoped, tag = 'scoped memory for tpu_custom_call.1']
    #allocation4 [shape = 's32[2]{0}', space=sflag, size = 0x8, scoped, tag = 'scoped memory for tpu_custom_call.1']
    #allocation5 [shape = 'u8[1024]{0}', space=vmem, size = 0x400, scoped, tag = 'input window, operand 1']
    #allocation6 [shape = 's32[2]{0}', space=sflag, size = 0x8, scoped, tag = 'scoped memory for tpu_custom_call.1']
    #allocation7 [shape = 'u8[8192]{0}', space=vmem, size = 0x2000, scoped, tag = 'input window, operand 2, single buffered']
    #allocation8 [shape = 'u8[8192]{0}', space=vmem, size = 0x2000, scoped, tag = 'output window, operand 0']
    %10 = vsyncpa [#allocation3], 0
    %s11 = scalar_lea.sflag [#allocation3], 1
    %12 = vsyncpa %s11, 0
    %13 = vsyncpa [#allocation6], 0
    %s14 = scalar_lea.sflag [#allocation6], 1
    %15 = vsyncpa %s14, 0
    %16 = vsyncpa [#allocation4], 0
    %s17 = scalar_lea.sflag [#allocation4], 1
    %18 = vsyncpa %s17, 0
    loop: start=0, step=1, limit=4
    $region2: #{tpu_custom_call.1} parent=1 // loop_pre_header
      _
    $region3: #{tpu_custom_call.1} parent=1 // loop_header
      %s20 = sphi 0, %s24
      %p21 = scmp.ge.s32.totalorder %s20, 4
      %s27 = sphi 0, %s39
      %s28 = sphi 0, %s35
      %s29 = sphi 0, %s27
      %s30 = sphi 0, %s28
      %s31 = sphi 0, %s29
      %s32 = sphi 0, %s30
      %s44 = sphi 0, %s46
      %s47 = sphi 0, %s44
      %s48 = sphi 0, %s47
      %s64 = sphi 0, %s48
      %s70 = sphi 0, %s72
      %s73 = sphi 0, %s70
      %s74 = sphi 0, %s73
      %s90 = sphi 0, %s74
      %s94 = sphi 0, %s94
      %s96 = sphi 0, %s94
      %s97 = sphi 0, %s96
      %s111 = sphi 0, %s97
      %s115 = sphi 0, %s115
      %s117 = sphi 0, %s115
      %s118 = sphi 0, %s117
      %s132 = sphi 0, %s118
      %s136 = sphi 0, %s136
      %s138 = sphi 0, %s136
      %s139 = sphi 0, %s138
      %s153 = sphi 0, %s139
      %s161 = sphi 0, %s163
      %s164 = sphi 0, %s161
      %s165 = sphi 0, %s164
      %s181 = sphi 0, %s165
    $region4: #{tpu_custom_call.1} parent=1 // loop_header_branch
      %23 = sbr.rel (%p21) target = $region8
    $region5: #{tpu_custom_call.1} parent=1 // loop_body
      %s25 = ssub.s32 %s20, 1
      %s26 = ssub.s32 %s20, 2
      %s33 = sadd.s32 1, %s28
      %p34 = scmp.ge.s32.totalorder %s33, 1
      %s35 = scalar_select %p34, 0, %s33
      %s36 = sadd.s32 1, %s27
      %s37 = scalar_select %p34, %s36, %s27
      %p38 = scmp.ge.s32.totalorder %s37, 2
      %s39 = scalar_select %p38, 0, %s37
      %s40 = ssub.s32 %s27, %s39
      %s41 = ssub.s32 %s28, %s35
      %s42 = sor.u32 %s40, %s41
      %p43 = scmp.eq.s32.totalorder %s42, 0
      %s45 = sadd.s32 %s44, 1
      %s46 = scalar_select %p43, %s44, %s45
      %p49 = pneg %p43
      %p50 = scmp.eq.s32.totalorder %s20, 1
      %p51 = por %p49, %p50
      %p52 = scmp.ne.s32.totalorder %s44, %s47
      %p53 = scmp.eq.s32.totalorder %s20, 0
      %p54 = por %p52, %p53
      %p55 = scmp.ne.s32.totalorder %s44, %s47
      %p56 = scmp.eq.s32.totalorder %s25, 1
      %p57 = por %p55, %p56
      %p58 = scmp.ne.s32.totalorder %s47, %s48
      %p59 = scmp.eq.s32.totalorder %s25, 0
      %p60 = por %p58, %p59
      %p61 = scmp.ne.s32.totalorder %s47, %s48
      %p62 = scmp.eq.s32.totalorder %s26, 1
      %p63 = por %p61, %p62
      %p65 = scmp.ne.s32.totalorder %s48, %s64
      %p66 = scmp.eq.s32.totalorder %s26, 0
      %p67 = por %p65, %p66
      %s68 = ssub.s32 %s27, %s39
      %p69 = scmp.eq.s32.totalorder %s68, 0
      %s71 = sadd.s32 %s70, 1
      %s72 = scalar_select %p69, %s70, %s71
      %p75 = pneg %p69
      %p76 = scmp.eq.s32.totalorder %s20, 1
      %p77 = por %p75, %p76
      %p78 = scmp.ne.s32.totalorder %s70, %s73
      %p79 = scmp.eq.s32.totalorder %s20, 0
      %p80 = por %p78, %p79
      %p81 = scmp.ne.s32.totalorder %s70, %s73
      %p82 = scmp.eq.s32.totalorder %s25, 1
      %p83 = por %p81, %p82
      %p84 = scmp.ne.s32.totalorder %s73, %s74
      %p85 = scmp.eq.s32.totalorder %s25, 0
      %p86 = por %p84, %p85
      %p87 = scmp.ne.s32.totalorder %s73, %s74
      %p88 = scmp.eq.s32.totalorder %s26, 1
      %p89 = por %p87, %p88
      %p91 = scmp.ne.s32.totalorder %s74, %s90
      %p92 = scmp.eq.s32.totalorder %s26, 0
      %p93 = por %p91, %p92
      %s95 = sadd.s32 %s94, 1
      %p98 = scmp.eq.s32.totalorder %s20, 1
      %p99 = scmp.ne.s32.totalorder %s94, %s96
      %p100 = scmp.eq.s32.totalorder %s20, 0
      %p101 = por %p99, %p100
      %p102 = scmp.ne.s32.totalorder %s94, %s96
      %p103 = scmp.eq.s32.totalorder %s25, 1
      %p104 = por %p102, %p103
      %p105 = scmp.ne.s32.totalorder %s96, %s97
      %p106 = scmp.eq.s32.totalorder %s25, 0
      %p107 = por %p105, %p106
      %p108 = scmp.ne.s32.totalorder %s96, %s97
      %p109 = scmp.eq.s32.totalorder %s26, 1
      %p110 = por %p108, %p109
      %p112 = scmp.ne.s32.totalorder %s97, %s111
      %p113 = scmp.eq.s32.totalorder %s26, 0
      %p114 = por %p112, %p113
      %s116 = sadd.s32 %s115, 1
      %p119 = scmp.eq.s32.totalorder %s20, 1
      %p120 = scmp.ne.s32.totalorder %s115, %s117
      %p121 = scmp.eq.s32.totalorder %s20, 0
      %p122 = por %p120, %p121
      %p123 = scmp.ne.s32.totalorder %s115, %s117
      %p124 = scmp.eq.s32.totalorder %s25, 1
      %p125 = por %p123, %p124
      %p126 = scmp.ne.s32.totalorder %s117, %s118
      %p127 = scmp.eq.s32.totalorder %s25, 0
      %p128 = por %p126, %p127
      %p129 = scmp.ne.s32.totalorder %s117, %s118
      %p130 = scmp.eq.s32.totalorder %s26, 1
      %p131 = por %p129, %p130
      %p133 = scmp.ne.s32.totalorder %s118, %s132
      %p134 = scmp.eq.s32.totalorder %s26, 0
      %p135 = por %p133, %p134
      %s137 = sadd.s32 %s136, 1
      %p140 = scmp.eq.s32.totalorder %s20, 1
      %p141 = scmp.ne.s32.totalorder %s136, %s138
      %p142 = scmp.eq.s32.totalorder %s20, 0
      %p143 = por %p141, %p142
      %p144 = scmp.ne.s32.totalorder %s136, %s138
      %p145 = scmp.eq.s32.totalorder %s25, 1
      %p146 = por %p144, %p145
      %p147 = scmp.ne.s32.totalorder %s138, %s139
      %p148 = scmp.eq.s32.totalorder %s25, 0
      %p149 = por %p147, %p148
      %p150 = scmp.ne.s32.totalorder %s138, %s139
      %p151 = scmp.eq.s32.totalorder %s26, 1
      %p152 = por %p150, %p151
      %p154 = scmp.ne.s32.totalorder %s139, %s153
      %p155 = scmp.eq.s32.totalorder %s26, 0
      %p156 = por %p154, %p155
      %s157 = ssub.s32 %s27, %s39
      %s158 = ssub.s32 %s28, %s35
      %s159 = sor.u32 %s157, %s158
      %p160 = scmp.eq.s32.totalorder %s159, 0
      %s162 = sadd.s32 %s161, 1
      %s163 = scalar_select %p160, %s161, %s162
      %p166 = pneg %p160
      %p167 = scmp.eq.s32.totalorder %s20, 1
      %p168 = por %p166, %p167
      %p169 = scmp.ne.s32.totalorder %s161, %s164
      %p170 = scmp.eq.s32.totalorder %s20, 0
      %p171 = por %p169, %p170
      %p172 = scmp.ne.s32.totalorder %s161, %s164
      %p173 = scmp.eq.s32.totalorder %s25, 1
      %p174 = por %p172, %p173
      %p175 = scmp.ne.s32.totalorder %s164, %s165
      %p176 = scmp.eq.s32.totalorder %s25, 0
      %p177 = por %p175, %p176
      %p178 = scmp.ne.s32.totalorder %s164, %s165
      %p179 = scmp.eq.s32.totalorder %s26, 1
      %p180 = por %p178, %p179
      %p182 = scmp.ne.s32.totalorder %s165, %s181
      %p183 = scmp.eq.s32.totalorder %s26, 0
      %p184 = por %p182, %p183
      %p185 = scmp.le.s32.totalorder 1, %s20
      %p186 = scmp.lt.s32.totalorder %s20, 3
      %p187 = pnand %p185, %p186
      %p188 = pneg %p187
      // Predicated region
      $region9: #{tpu_custom_call.1} parent=5 // pred_check
        _
      $region10: #{tpu_custom_call.1} parent=5 // pred_check_branch
        %190 = sbr.rel (%p187) target = $region12
      $region11: #{tpu_custom_call.1} parent=5 // pred_region
        %s191 = ssub.s32 %s20, 1
        // Predicated region
        $region13: #{tpu_custom_call.1} parent=11 // pred_check
          %p192 = pneg %p107
        $region14: #{tpu_custom_call.1} parent=11 // pred_check_branch
          %194 = sbr.rel (%p192) target = $region16
        $region15: #{tpu_custom_call.1} parent=11 // pred_region
          %196 = vsyncadd [#allocation6], 0
          %s197 = sshll.u32 %s2, 4
          %s198 = int_to_ptr.hbm [resolvable:$true] %s197
          %s199 = sshll.u32 [#allocation7], 4
          %s200 = int_to_ptr.vmem [resolvable:$true] %s199
          %205 = dma.hbm_to_vmem [thread:$0]  %s198, 256, %s200, [#allocation6], 64, 64, 4
        $region16: #{tpu_custom_call.1} parent=11 // pred_fallthru
          _
        // Predicated region
        $region17: #{tpu_custom_call.1} parent=11 // pred_check
          %p206 = pneg %p128
        $region18: #{tpu_custom_call.1} parent=11 // pred_check_branch
          %208 = sbr.rel (%p206) target = $region20
        $region19: #{tpu_custom_call.1} parent=11 // pred_region
          _
        $region20: #{tpu_custom_call.1} parent=11 // pred_fallthru
          _
        // Predicated region
        $region21: #{tpu_custom_call.1} parent=11 // pred_check
          %p209 = pneg %p149
        $region22: #{tpu_custom_call.1} parent=11 // pred_check_branch
          %211 = sbr.rel (%p209) target = $region24
        $region23: #{tpu_custom_call.1} parent=11 // pred_region
          _
        $region24: #{tpu_custom_call.1} parent=11 // pred_fallthru
          _
      $region12: #{tpu_custom_call.1} parent=5 // pred_fallthru
        _
      %p212 = scmp.lt.s32.totalorder %s20, 2
      // Predicated region
      $region25: #{tpu_custom_call.1} parent=5 // pred_check
        %p213 = pneg %p212
      $region26: #{tpu_custom_call.1} parent=5 // pred_check_branch
        %215 = sbr.rel (%p213) target = $region28
      $region27: #{tpu_custom_call.1} parent=5 // pred_region
        // Predicated region
        $region29: #{tpu_custom_call.1} parent=27 // pred_check
          %p216 = pneg %p54
        $region30: #{tpu_custom_call.1} parent=27 // pred_check_branch
          %218 = sbr.rel (%p216) target = $region32
        $region31: #{tpu_custom_call.1} parent=27 // pred_region
          %s219 = sand.u32 %s44, 1
          %s220 = scalar_lea.sflag [#allocation3], %s219
          %s221 = sand.u32 %s44, 1
          %s222 = smul.addr %s221, 8
          %s223 = scalar_lea.vmem [#allocation2], %s222
          %225 = vsyncadd %s220, 0
          %s226 = sadd.s32 %s28, %s27
          %s227 = smul.addr %s226, 8
          %s228 = scalar_lea.hbm %s0, %s227
          %s230 = sshll.u32 %s228, 4
          %s231 = int_to_ptr.hbm [resolvable:$true] %s230
          %s232 = sshll.u32 %s223, 4
          %s233 = int_to_ptr.vmem [resolvable:$true] %s232
          %235 = dma.hbm_to_vmem [thread:$0]  %s231, 128, %s233, %s220
        $region32: #{tpu_custom_call.1} parent=27 // pred_fallthru
          _
        // Predicated region
        $region33: #{tpu_custom_call.1} parent=27 // pred_check
          %p236 = pneg %p80
        $region34: #{tpu_custom_call.1} parent=27 // pred_check_branch
          %238 = sbr.rel (%p236) target = $region36
        $region35: #{tpu_custom_call.1} parent=27 // pred_region
          %s239 = sand.u32 %s20, 1
          %s240 = scalar_lea.sflag [#allocation6], %s239
          %s241 = sand.u32 %s70, 1
          %s242 = scalar_lea.vmem [#allocation5], %s241
          %244 = vsyncadd %s240, 0
          %s245 = scalar_lea.hbm %s1, %s27
          %s247 = sshll.u32 %s245, 4
          %s248 = int_to_ptr.hbm [resolvable:$true] %s247
          %s249 = sshll.u32 %s242, 4
          %s250 = int_to_ptr.vmem [resolvable:$true] %s249
          %252 = dma.hbm_to_vmem [thread:$0]  %s248, 16, %s250, %s240
        $region36: #{tpu_custom_call.1} parent=27 // pred_fallthru
          _
      $region28: #{tpu_custom_call.1} parent=5 // pred_fallthru
        _
      %p253 = scmp.le.s32.totalorder 1, %s20
      %p254 = scmp.lt.s32.totalorder %s20, 3
      %p255 = pnand %p253, %p254
      %p256 = pneg %p255
      // Predicated region
      $region37: #{tpu_custom_call.1} parent=5 // pred_check
        _
      $region38: #{tpu_custom_call.1} parent=5 // pred_check_branch
        %258 = sbr.rel (%p255) target = $region40
      $region39: #{tpu_custom_call.1} parent=5 // pred_region
        %s259 = ssub.s32 %s20, 1
        %s260 = sand.u32 %s47, 1
        %s261 = scalar_lea.sflag [#allocation3], %s260
        %s262 = sand.u32 %s47, 1
        %s263 = smul.addr %s262, 8
        %s264 = scalar_lea.vmem [#allocation2], %s263
        // Predicated region
        $region41: #{tpu_custom_call.1} parent=39 // pred_check
          %p265 = pneg %p60
        $region42: #{tpu_custom_call.1} parent=39 // pred_check_branch
          %267 = sbr.rel (%p265) target = $region44
        $region43: #{tpu_custom_call.1} parent=39 // pred_region
          %269 = dma.done %s261, 128
        $region44: #{tpu_custom_call.1} parent=39 // pred_fallthru
          _
        %s270 = sand.u32 %s25, 1
        %s271 = scalar_lea.sflag [#allocation6], %s270
        %s272 = sand.u32 %s73, 1
        %s273 = scalar_lea.vmem [#allocation5], %s272
        // Predicated region
        $region45: #{tpu_custom_call.1} parent=39 // pred_check
          %p274 = pneg %p86
        $region46: #{tpu_custom_call.1} parent=39 // pred_check_branch
          %276 = sbr.rel (%p274) target = $region48
        $region47: #{tpu_custom_call.1} parent=39 // pred_region
          %278 = dma.done %s271, 16
        $region48: #{tpu_custom_call.1} parent=39 // pred_fallthru
          _
        // Predicated region
        $region49: #{tpu_custom_call.1} parent=39 // pred_check
          %p279 = pneg %p107
        $region50: #{tpu_custom_call.1} parent=39 // pred_check_branch
          %281 = sbr.rel (%p279) target = $region52
        $region51: #{tpu_custom_call.1} parent=39 // pred_region
          %283 = dma.done [#allocation6], 256
        $region52: #{tpu_custom_call.1} parent=39 // pred_fallthru
          _
        %s284 = sand.u32 %s47, 1
        %s285 = scalar_lea.sflag [#allocation3], %s284
        %s286 = sand.u32 %s47, 1
        %s287 = smul.addr %s286, 8
        %s288 = scalar_lea.vmem [#allocation2], %s287
        %p289 = pneg %p60
        %p290 = pneg %p57
        %s291 = sand.u32 %s25, 1
        %s292 = scalar_lea.sflag [#allocation6], %s291
        %s293 = sand.u32 %s73, 1
        %s294 = scalar_lea.vmem [#allocation5], %s293
        %p295 = pneg %p86
        %p296 = pneg %p83
        %p297 = pneg %p107
        %p298 = pneg %p104
        %p299 = pneg %p128
        %p300 = pneg %p125
        %p301 = pneg %p149
        %p302 = pneg %p146
        %p303 = pneg %p177
        %p304 = pneg %p174
        %s305 = sand.u32 %s164, 1
        %s306 = scalar_lea.sflag [#allocation4], %s305
        %s307 = sand.u32 %s164, 1
        %s308 = smul.addr %s307, 8
        %s309 = scalar_lea.vmem [#allocation8], %s308
        %v311 = vld [vmem:[%s264] sm:$0xff]
        %v312 = vpack.c.bf16 %v311, %v311
        %v313 = vld [vmem:[#allocation7] sm:$0xf]
        %v314 = vld [vmem:[#allocation7 + $0x4] sm:$0xf]
        %v315 = vld [vmem:[#allocation7 + $0x8] sm:$0xf]
        %v316 = vld [vmem:[#allocation7 + $0xc] sm:$0xf]
        %v317 = vld [vmem:[%s273] sm:$0x1]
        %v319 = vperm.slane %v317, 0
        %v325 = vunpack.c.l.b16 %v313
        %v326 = vunpack.c.l.b16 %v314
        %v327 = vunpack.c.l.b16 %v315
        %v328 = vunpack.c.l.b16 %v316
        %v329 = vpack.c.b16 %v326, %v325
        %v330 = vpack.c.b16 %v328, %v327
        %vm333 = vcmask 261120
        %v335 = vsel %vm333, %v312, 0
        %337 = vmatpush.bf16.msra.mxu0 0
        %338 = vmatpush.bf16.msra.mxu0 0
        %339 = vmatpush.bf16.msra.mxu0 0
        %340 = vmatpush.bf16.msra.mxu0 0
        %341 = vmatpush.bf16.msra.mxu0 0
        %342 = vmatpush.bf16.msra.mxu0 0
        %343 = vmatpush.bf16.msra.mxu0 %v330
        %344 = vmatpush.bf16.msra.mxu0 %v329
        %345 = vmatmul.bf16.gmra.mxu0 %v335
        %v346 = vpop.f32.mrf.mxu0
        %v347 = vadd.f32 %v319, %v346
        %v348 = vpop.f32.mrf.mxu0
        %349 = vdwg.mxu0
        %v350 = vsel %vm333, %v347, 0.0
        %351 = vadd.xlane.f32.xlu0 %v350
        %v352 = vpop.xlane.xlu0 %351
        %v353 = vmul.f32 %v352, 0.03125
        %v354 = vsub.f32 %v347, %v353
        %v355 = vmul.f32 %v354, %v354
        %v356 = vsel %vm333, %v355, 0.0
        %357 = vadd.xlane.f32.xlu0 %v356
        %v358 = vpop.xlane.xlu0 %357
        %v359 = vmul.f32 %v358, 0.03125
        %v360 = vadd.f32 %v359, 1e-05
        %v361 = vrsqrt.pop %v360
        %v362 = vmul.f32 %v361, %v360
        %v363 = vmul.f32 %v362, %v361
        %v364 = vmul.f32 0.5, %v363
        %v365 = vsub.f32 1.5, %v364
        %v366 = vmul.f32 %v361, %v365
        %vm367 = vweird.f32 %v360
        %vm368 = vweird.f32 %v361
        %vm369 = vmor %vm367, %vm368
        %v370 = vsel %vm369, %v361, %v366
        %v371 = vmul.f32 %v354, %v370
        %v372 = vld [vmem:[%s3] sm:$0x1]
        %v374 = vperm.slane %v372, 0
        %v376 = vmul.f32 %v371, %v374
        %v377 = vld [vmem:[%s4] sm:$0x1]
        %v379 = vperm.slane %v377, 0
        %v381 = vadd.f32 %v376, %v379
        %v382 = vtanh.pop %v381
        %383 = vst.msk [vmem:[%s309] sm:$0xff] %vm333, %v382
        %s384 = sand.u32 %s164, 1
        %s385 = scalar_lea.sflag [#allocation4], %s384
        %s386 = sand.u32 %s164, 1
        %s387 = smul.addr %s386, 8
        %s388 = scalar_lea.vmem [#allocation8], %s387
        // Predicated region
        $region53: #{tpu_custom_call.1} parent=39 // pred_check
          %p389 = pneg %p174
        $region54: #{tpu_custom_call.1} parent=39 // pred_check_branch
          %391 = sbr.rel (%p389) target = $region56
        $region55: #{tpu_custom_call.1} parent=39 // pred_region
          %393 = vsyncadd %s385, 0
          %s394 = sadd.s32 %s30, %s29
          %s395 = smul.addr %s394, 8
          %s396 = scalar_lea.hbm %s5, %s395
          %s398 = sshll.u32 %s388, 4
          %s399 = int_to_ptr.vmem [resolvable:$true] %s398
          %s400 = sshll.u32 %s396, 4
          %s401 = int_to_ptr.hbm [resolvable:$true] %s400
          %403 = dma.vmem_to_hbm [thread:$0]  %s399, 128, %s401, %s385
        $region56: #{tpu_custom_call.1} parent=39 // pred_fallthru
          _
      $region40: #{tpu_custom_call.1} parent=5 // pred_fallthru
        _
      %p404 = scmp.le.s32.totalorder 2, %s20
      // Predicated region
      $region57: #{tpu_custom_call.1} parent=5 // pred_check
        %p405 = pneg %p404
      $region58: #{tpu_custom_call.1} parent=5 // pred_check_branch
        %407 = sbr.rel (%p405) target = $region60
      $region59: #{tpu_custom_call.1} parent=5 // pred_region
        %s408 = ssub.s32 %s20, 2
        // Predicated region
        $region61: #{tpu_custom_call.1} parent=59 // pred_check
          %p409 = pneg %p180
        $region62: #{tpu_custom_call.1} parent=59 // pred_check_branch
          %411 = sbr.rel (%p409) target = $region64
        $region63: #{tpu_custom_call.1} parent=59 // pred_region
          %s412 = sand.u32 %s165, 1
          %s413 = scalar_lea.sflag [#allocation4], %s412
          %s414 = sand.u32 %s165, 1
          %s415 = smul.addr %s414, 8
          %s416 = scalar_lea.vmem [#allocation8], %s415
          %418 = dma.done %s413, 128
        $region64: #{tpu_custom_call.1} parent=59 // pred_fallthru
          _
      $region60: #{tpu_custom_call.1} parent=5 // pred_fallthru
        _
    $region6: #{tpu_custom_call.1} parent=1 // loop_footer
      %s24 = sadd.s32 1, %s20
    $region7: #{tpu_custom_call.1} parent=1 // loop_footer_branch
      %19 = sbr.rel target = $region3
    $region8: #{tpu_custom_call.1} parent=1 // loop_exit
      _
    %419 = vsyncpa [#allocation3], 1
    %s420 = scalar_lea.sflag [#allocation3], 1
    %421 = vsyncpa %s420, 1
    %422 = vsyncpa [#allocation6], 1
    %s423 = scalar_lea.sflag [#allocation6], 1
    %424 = vsyncpa %s423, 1
    %425 = vsyncpa [#allocation4], 1
    %s426 = scalar_lea.sflag [#allocation4], 1
    %427 = vsyncpa %s426, 1

// kernel: tpu_custom_call.1
$region0: #{tpu_custom_call.1}
  #allocation0 [shape = 'u32[]', space=smem, size = 0x4, offset = 0x4, fixed_abs, tag = 'smem constant byte address 0x4 - core index']
  #allocation1 [shape = 'u32[72,128]{1,0:T(1,128)}', space=vmem, size = 0x9000, scoped, tag = 'internal scratch']
  %s0 = inlined_call_operand.hbm [shape: f32[2,8,32], index: 0, kind: input, shape index: {}]
  %s1 = inlined_call_operand.hbm [shape: f32[2,1,32], index: 1, kind: input, shape index: {}]
  %s2 = inlined_call_operand.hbm [shape: bf16[32,32], index: 2, kind: input, shape index: {}]
  %s3 = inlined_call_operand.vmem [shape: f32[1,32], index: 3, kind: input, shape index: {}]
  %s4 = inlined_call_operand.vmem [shape: f32[1,32], index: 4, kind: input, shape index: {}]
  %s5 = inlined_call_operand.hbm [shape: f32[2,8,32], index: 5, kind: output, shape index: {}]
  %s6 = sld [smem:[#allocation0]]
  $region65: #{tpu_custom_call.1} parent=0
    _
  %s8 = ssub.s32 1, %s6
  %s9 = scalar_select 0, %s8, %s6
  $region1: #{tpu_custom_call.1} parent=0
    #allocation2 [shape = 'u8[8192]{0}', space=vmem, size = 0x2000, scoped, tag = 'input window, operand 0']
    #allocation3 [shape = 's32[2]{0}', space=sflag, size = 0x8, scoped, tag = 'scoped memory for tpu_custom_call.1']
    #allocation4 [shape = 's32[2]{0}', space=sflag, size = 0x8, scoped, tag = 'scoped memory for tpu_custom_call.1']
    #allocation5 [shape = 'u8[1024]{0}', space=vmem, size = 0x400, scoped, tag = 'input window, operand 1']
    #allocation6 [shape = 's32[2]{0}', space=sflag, size = 0x8, scoped, tag = 'scoped memory for tpu_custom_call.1']
    #allocation7 [shape = 'u8[8192]{0}', space=vmem, size = 0x2000, scoped, tag = 'input window, operand 2, single buffered']
    #allocation8 [shape = 'u8[8192]{0}', space=vmem, size = 0x2000, scoped, tag = 'output window, operand 0']
    %10 = vsyncpa [#allocation3], 0
    %s11 = scalar_lea.sflag [#allocation3], 1
    %12 = vsyncpa %s11, 0
    %13 = vsyncpa [#allocation6], 0
    %s14 = scalar_lea.sflag [#allocation6], 1
    %15 = vsyncpa %s14, 0
    %16 = vsyncpa [#allocation4], 0
    %s17 = scalar_lea.sflag [#allocation4], 1
    %18 = vsyncpa %s17, 0
    loop: start=0, step=1, limit=4
    $region2: #{tpu_custom_call.1} parent=1 // loop_pre_header
      _
    $region3: #{tpu_custom_call.1} parent=1 // loop_header
      %s20 = sphi 0, %s24
      %p21 = scmp.ge.s32.totalorder %s20, 4
      %s27 = sphi 0, %s39
      %s28 = sphi 0, %s35
      %s29 = sphi 0, %s27
      %s30 = sphi 0, %s28
      %s31 = sphi 0, %s29
      %s32 = sphi 0, %s30
      %s44 = sphi 0, %s46
      %s47 = sphi 0, %s44
      %s48 = sphi 0, %s47
      %s64 = sphi 0, %s48
      %s70 = sphi 0, %s72
      %s73 = sphi 0, %s70
      %s74 = sphi 0, %s73
      %s90 = sphi 0, %s74
      %s94 = sphi 0, %s94
      %s96 = sphi 0, %s94
      %s97 = sphi 0, %s96
      %s111 = sphi 0, %s97
      %s115 = sphi 0, %s115
      %s117 = sphi 0, %s115
      %s118 = sphi 0, %s117
      %s132 = sphi 0, %s118
      %s136 = sphi 0, %s136
      %s138 = sphi 0, %s136
      %s139 = sphi 0, %s138
      %s153 = sphi 0, %s139
      %s161 = sphi 0, %s163
      %s164 = sphi 0, %s161
      %s165 = sphi 0, %s164
      %s181 = sphi 0, %s165
    $region4: #{tpu_custom_call.1} parent=1 // loop_header_branch
      %23 = sbr.rel (%p21) target = $region8
    $region5: #{tpu_custom_call.1} parent=1 // loop_body
      %s25 = ssub.s32 %s20, 1
      %s26 = ssub.s32 %s20, 2
      %s33 = sadd.s32 1, %s28
      %p34 = scmp.ge.s32.totalorder %s33, 1
      %s35 = scalar_select %p34, 0, %s33
      %s36 = sadd.s32 1, %s27
      %s37 = scalar_select %p34, %s36, %s27
      %p38 = scmp.ge.s32.totalorder %s37, 2
      %s39 = scalar_select %p38, 0, %s37
      %s40 = ssub.s32 %s27, %s39
      %s41 = ssub.s32 %s28, %s35
      %s42 = sor.u32 %s40, %s41
      %p43 = scmp.eq.s32.totalorder %s42, 0
      %s45 = sadd.s32 %s44, 1
      %s46 = scalar_select %p43, %s44, %s45
      %p49 = pneg %p43
      %p50 = scmp.eq.s32.totalorder %s20, 1
      %p51 = por %p49, %p50
      %p52 = scmp.ne.s32.totalorder %s44, %s47
      %p53 = scmp.eq.s32.totalorder %s20, 0
      %p54 = por %p52, %p53
      %p55 = scmp.ne.s32.totalorder %s44, %s47
      %p56 = scmp.eq.s32.totalorder %s25, 1
      %p57 = por %p55, %p56
      %p58 = scmp.ne.s32.totalorder %s47, %s48
      %p59 = scmp.eq.s32.totalorder %s25, 0
      %p60 = por %p58, %p59
      %p61 = scmp.ne.s32.totalorder %s47, %s48
      %p62 = scmp.eq.s32.totalorder %s26, 1
      %p63 = por %p61, %p62
      %p65 = scmp.ne.s32.totalorder %s48, %s64
      %p66 = scmp.eq.s32.totalorder %s26, 0
      %p67 = por %p65, %p66
      %s68 = ssub.s32 %s27, %s39
      %p69 = scmp.eq.s32.totalorder %s68, 0
      %s71 = sadd.s32 %s70, 1
      %s72 = scalar_select %p69, %s70, %s71
      %p75 = pneg %p69
      %p76 = scmp.eq.s32.totalorder %s20, 1
      %p77 = por %p75, %p76
      %p78 = scmp.ne.s32.totalorder %s70, %s73
      %p79 = scmp.eq.s32.totalorder %s20, 0
      %p80 = por %p78, %p79
      %p81 = scmp.ne.s32.totalorder %s70, %s73
      %p82 = scmp.eq.s32.totalorder %s25, 1
      %p83 = por %p81, %p82
      %p84 = scmp.ne.s32.totalorder %s73, %s74
      %p85 = scmp.eq.s32.totalorder %s25, 0
      %p86 = por %p84, %p85
      %p87 = scmp.ne.s32.totalorder %s73, %s74
      %p88 = scmp.eq.s32.totalorder %s26, 1
      %p89 = por %p87, %p88
      %p91 = scmp.ne.s32.totalorder %s74, %s90
      %p92 = scmp.eq.s32.totalorder %s26, 0
      %p93 = por %p91, %p92
      %s95 = sadd.s32 %s94, 1
      %p98 = scmp.eq.s32.totalorder %s20, 1
      %p99 = scmp.ne.s32.totalorder %s94, %s96
      %p100 = scmp.eq.s32.totalorder %s20, 0
      %p101 = por %p99, %p100
      %p102 = scmp.ne.s32.totalorder %s94, %s96
      %p103 = scmp.eq.s32.totalorder %s25, 1
      %p104 = por %p102, %p103
      %p105 = scmp.ne.s32.totalorder %s96, %s97
      %p106 = scmp.eq.s32.totalorder %s25, 0
      %p107 = por %p105, %p106
      %p108 = scmp.ne.s32.totalorder %s96, %s97
      %p109 = scmp.eq.s32.totalorder %s26, 1
      %p110 = por %p108, %p109
      %p112 = scmp.ne.s32.totalorder %s97, %s111
      %p113 = scmp.eq.s32.totalorder %s26, 0
      %p114 = por %p112, %p113
      %s116 = sadd.s32 %s115, 1
      %p119 = scmp.eq.s32.totalorder %s20, 1
      %p120 = scmp.ne.s32.totalorder %s115, %s117
      %p121 = scmp.eq.s32.totalorder %s20, 0
      %p122 = por %p120, %p121
      %p123 = scmp.ne.s32.totalorder %s115, %s117
      %p124 = scmp.eq.s32.totalorder %s25, 1
      %p125 = por %p123, %p124
      %p126 = scmp.ne.s32.totalorder %s117, %s118
      %p127 = scmp.eq.s32.totalorder %s25, 0
      %p128 = por %p126, %p127
      %p129 = scmp.ne.s32.totalorder %s117, %s118
      %p130 = scmp.eq.s32.totalorder %s26, 1
      %p131 = por %p129, %p130
      %p133 = scmp.ne.s32.totalorder %s118, %s132
      %p134 = scmp.eq.s32.totalorder %s26, 0
      %p135 = por %p133, %p134
      %s137 = sadd.s32 %s136, 1
      %p140 = scmp.eq.s32.totalorder %s20, 1
      %p141 = scmp.ne.s32.totalorder %s136, %s138
      %p142 = scmp.eq.s32.totalorder %s20, 0
      %p143 = por %p141, %p142
      %p144 = scmp.ne.s32.totalorder %s136, %s138
      %p145 = scmp.eq.s32.totalorder %s25, 1
      %p146 = por %p144, %p145
      %p147 = scmp.ne.s32.totalorder %s138, %s139
      %p148 = scmp.eq.s32.totalorder %s25, 0
      %p149 = por %p147, %p148
      %p150 = scmp.ne.s32.totalorder %s138, %s139
      %p151 = scmp.eq.s32.totalorder %s26, 1
      %p152 = por %p150, %p151
      %p154 = scmp.ne.s32.totalorder %s139, %s153
      %p155 = scmp.eq.s32.totalorder %s26, 0
      %p156 = por %p154, %p155
      %s157 = ssub.s32 %s27, %s39
      %s158 = ssub.s32 %s28, %s35
      %s159 = sor.u32 %s157, %s158
      %p160 = scmp.eq.s32.totalorder %s159, 0
      %s162 = sadd.s32 %s161, 1
      %s163 = scalar_select %p160, %s161, %s162
      %p166 = pneg %p160
      %p167 = scmp.eq.s32.totalorder %s20, 1
      %p168 = por %p166, %p167
      %p169 = scmp.ne.s32.totalorder %s161, %s164
      %p170 = scmp.eq.s32.totalorder %s20, 0
      %p171 = por %p169, %p170
      %p172 = scmp.ne.s32.totalorder %s161, %s164
      %p173 = scmp.eq.s32.totalorder %s25, 1
      %p174 = por %p172, %p173
      %p175 = scmp.ne.s32.totalorder %s164, %s165
      %p176 = scmp.eq.s32.totalorder %s25, 0
      %p177 = por %p175, %p176
      %p178 = scmp.ne.s32.totalorder %s164, %s165
      %p179 = scmp.eq.s32.totalorder %s26, 1
      %p180 = por %p178, %p179
      %p182 = scmp.ne.s32.totalorder %s165, %s181
      %p183 = scmp.eq.s32.totalorder %s26, 0
      %p184 = por %p182, %p183
      %p185 = scmp.le.s32.totalorder 1, %s20
      %p186 = scmp.lt.s32.totalorder %s20, 3
      %p187 = pnand %p185, %p186
      %p188 = pneg %p187
      // Predicated region
      $region9: #{tpu_custom_call.1} parent=5 // pred_check
        _
      $region10: #{tpu_custom_call.1} parent=5 // pred_check_branch
        %190 = sbr.rel (%p187) target = $region12
      $region11: #{tpu_custom_call.1} parent=5 // pred_region
        %s191 = ssub.s32 %s20, 1
        // Predicated region
        $region13: #{tpu_custom_call.1} parent=11 // pred_check
          %p192 = pneg %p107
        $region14: #{tpu_custom_call.1} parent=11 // pred_check_branch
          %194 = sbr.rel (%p192) target = $region16
        $region15: #{tpu_custom_call.1} parent=11 // pred_region
          %196 = vsyncadd [#allocation6], 0
          %s197 = sshll.u32 %s2, 4
          %s198 = int_to_ptr.hbm [resolvable:$true] %s197
          %s199 = sshll.u32 [#allocation7], 4
          %s200 = int_to_ptr.vmem [resolvable:$true] %s199
          %205 = dma.hbm_to_vmem [thread:$0]  %s198, 256, %s200, [#allocation6], 64, 64, 4
        $region16: #{tpu_custom_call.1} parent=11 // pred_fallthru
          _
        // Predicated region
        $region17: #{tpu_custom_call.1} parent=11 // pred_check
          %p206 = pneg %p128
        $region18: #{tpu_custom_call.1} parent=11 // pred_check_branch
          %208 = sbr.rel (%p206) target = $region20
        $region19: #{tpu_custom_call.1} parent=11 // pred_region
          _
        $region20: #{tpu_custom_call.1} parent=11 // pred_fallthru
          _
        // Predicated region
        $region21: #{tpu_custom_call.1} parent=11 // pred_check
          %p209 = pneg %p149
        $region22: #{tpu_custom_call.1} parent=11 // pred_check_branch
          %211 = sbr.rel (%p209) target = $region24
        $region23: #{tpu_custom_call.1} parent=11 // pred_region
          _
        $region24: #{tpu_custom_call.1} parent=11 // pred_fallthru
          _
      $region12: #{tpu_custom_call.1} parent=5 // pred_fallthru
        _
      %p212 = scmp.lt.s32.totalorder %s20, 2
      // Predicated region
      $region25: #{tpu_custom_call.1} parent=5 // pred_check
        %p213 = pneg %p212
      $region26: #{tpu_custom_call.1} parent=5 // pred_check_branch
        %215 = sbr.rel (%p213) target = $region28
      $region27: #{tpu_custom_call.1} parent=5 // pred_region
        // Predicated region
        $region29: #{tpu_custom_call.1} parent=27 // pred_check
          %p216 = pneg %p54
        $region30: #{tpu_custom_call.1} parent=27 // pred_check_branch
          %218 = sbr.rel (%p216) target = $region32
        $region31: #{tpu_custom_call.1} parent=27 // pred_region
          %s219 = sand.u32 %s44, 1
          %s220 = scalar_lea.sflag [#allocation3], %s219
          %s221 = sand.u32 %s44, 1
          %s222 = smul.addr %s221, 8
          %s223 = scalar_lea.vmem [#allocation2], %s222
          %225 = vsyncadd %s220, 0
          %s226 = sadd.s32 %s28, %s27
          %s227 = smul.addr %s226, 8
          %s228 = scalar_lea.hbm %s0, %s227
          %s230 = sshll.u32 %s228, 4
          %s231 = int_to_ptr.hbm [resolvable:$true] %s230
          %s232 = sshll.u32 %s223, 4
          %s233 = int_to_ptr.vmem [resolvable:$true] %s232
          %235 = dma.hbm_to_vmem [thread:$0]  %s231, 128, %s233, %s220
        $region32: #{tpu_custom_call.1} parent=27 // pred_fallthru
          _
        // Predicated region
        $region33: #{tpu_custom_call.1} parent=27 // pred_check
          %p236 = pneg %p80
        $region34: #{tpu_custom_call.1} parent=27 // pred_check_branch
          %238 = sbr.rel (%p236) target = $region36
        $region35: #{tpu_custom_call.1} parent=27 // pred_region
          %s239 = sand.u32 %s20, 1
          %s240 = scalar_lea.sflag [#allocation6], %s239
          %s241 = sand.u32 %s70, 1
          %s242 = scalar_lea.vmem [#allocation5], %s241
          %244 = vsyncadd %s240, 0
          %s245 = scalar_lea.hbm %s1, %s27
          %s247 = sshll.u32 %s245, 4
          %s248 = int_to_ptr.hbm [resolvable:$true] %s247
          %s249 = sshll.u32 %s242, 4
          %s250 = int_to_ptr.vmem [resolvable:$true] %s249
          %252 = dma.hbm_to_vmem [thread:$0]  %s248, 16, %s250, %s240
        $region36: #{tpu_custom_call.1} parent=27 // pred_fallthru
          _
      $region28: #{tpu_custom_call.1} parent=5 // pred_fallthru
        _
      %p253 = scmp.le.s32.totalorder 1, %s20
      %p254 = scmp.lt.s32.totalorder %s20, 3
      %p255 = pnand %p253, %p254
      %p256 = pneg %p255
      // Predicated region
      $region37: #{tpu_custom_call.1} parent=5 // pred_check
        _
      $region38: #{tpu_custom_call.1} parent=5 // pred_check_branch
        %258 = sbr.rel (%p255) target = $region40
      $region39: #{tpu_custom_call.1} parent=5 // pred_region
        %s259 = ssub.s32 %s20, 1
        %s260 = sand.u32 %s47, 1
        %s261 = scalar_lea.sflag [#allocation3], %s260
        %s262 = sand.u32 %s47, 1
        %s263 = smul.addr %s262, 8
        %s264 = scalar_lea.vmem [#allocation2], %s263
        // Predicated region
        $region41: #{tpu_custom_call.1} parent=39 // pred_check
          %p265 = pneg %p60
        $region42: #{tpu_custom_call.1} parent=39 // pred_check_branch
          %267 = sbr.rel (%p265) target = $region44
        $region43: #{tpu_custom_call.1} parent=39 // pred_region
          %269 = dma.done %s261, 128
        $region44: #{tpu_custom_call.1} parent=39 // pred_fallthru
          _
        %s270 = sand.u32 %s25, 1
        %s271 = scalar_lea.sflag [#allocation6], %s270
        %s272 = sand.u32 %s73, 1
        %s273 = scalar_lea.vmem [#allocation5], %s272
        // Predicated region
        $region45: #{tpu_custom_call.1} parent=39 // pred_check
          %p274 = pneg %p86
        $region46: #{tpu_custom_call.1} parent=39 // pred_check_branch
          %276 = sbr.rel (%p274) target = $region48
        $region47: #{tpu_custom_call.1} parent=39 // pred_region
          %278 = dma.done %s271, 16
        $region48: #{tpu_custom_call.1} parent=39 // pred_fallthru
          _
        // Predicated region
        $region49: #{tpu_custom_call.1} parent=39 // pred_check
          %p279 = pneg %p107
        $region50: #{tpu_custom_call.1} parent=39 // pred_check_branch
          %281 = sbr.rel (%p279) target = $region52
        $region51: #{tpu_custom_call.1} parent=39 // pred_region
          %283 = dma.done [#allocation6], 256
        $region52: #{tpu_custom_call.1} parent=39 // pred_fallthru
          _
        %s284 = sand.u32 %s47, 1
        %s285 = scalar_lea.sflag [#allocation3], %s284
        %s286 = sand.u32 %s47, 1
        %s287 = smul.addr %s286, 8
        %s288 = scalar_lea.vmem [#allocation2], %s287
        %p289 = pneg %p60
        %p290 = pneg %p57
        %s291 = sand.u32 %s25, 1
        %s292 = scalar_lea.sflag [#allocation6], %s291
        %s293 = sand.u32 %s73, 1
        %s294 = scalar_lea.vmem [#allocation5], %s293
        %p295 = pneg %p86
        %p296 = pneg %p83
        %p297 = pneg %p107
        %p298 = pneg %p104
        %p299 = pneg %p128
        %p300 = pneg %p125
        %p301 = pneg %p149
        %p302 = pneg %p146
        %p303 = pneg %p177
        %p304 = pneg %p174
        %s305 = sand.u32 %s164, 1
        %s306 = scalar_lea.sflag [#allocation4], %s305
        %s307 = sand.u32 %s164, 1
        %s308 = smul.addr %s307, 8
        %s309 = scalar_lea.vmem [#allocation8], %s308
        %v311 = vld [vmem:[%s264] sm:$0xff]
        %v312 = vpack.c.bf16 %v311, %v311
        %v313 = vld [vmem:[#allocation7] sm:$0xf]
        %v314 = vld [vmem:[#allocation7 + $0x4] sm:$0xf]
        %v315 = vld [vmem:[#allocation7 + $0x8] sm:$0xf]
        %v316 = vld [vmem:[#allocation7 + $0xc] sm:$0xf]
        %v317 = vld [vmem:[%s273] sm:$0x1]
        %v319 = vperm.slane %v317, 0
        %v325 = vunpack.c.l.b16 %v313
        %v326 = vunpack.c.l.b16 %v314
        %v327 = vunpack.c.l.b16 %v315
        %v328 = vunpack.c.l.b16 %v316
        %v329 = vpack.c.b16 %v326, %v325
        %v330 = vpack.c.b16 %v328, %v327
        %vm333 = vcmask 261120
        %v335 = vsel %vm333, %v312, 0
        %337 = vmatpush.bf16.msra.mxu0 0
        %338 = vmatpush.bf16.msra.mxu0 0
        %339 = vmatpush.bf16.msra.mxu0 0
        %340 = vmatpush.bf16.msra.mxu0 0
        %341 = vmatpush.bf16.msra.mxu0 0
        %342 = vmatpush.bf16.msra.mxu0 0
        %343 = vmatpush.bf16.msra.mxu0 %v330
        %344 = vmatpush.bf16.msra.mxu0 %v329
        %345 = vmatmul.bf16.gmra.mxu0 %v335
        %v346 = vpop.f32.mrf.mxu0
        %v347 = vadd.f32 %v319, %v346
        %v348 = vpop.f32.mrf.mxu0
        %349 = vdwg.mxu0
        %v350 = vsel %vm333, %v347, 0.0
        %351 = vadd.xlane.f32.xlu0 %v350
        %v352 = vpop.xlane.xlu0 %351
        %v353 = vmul.f32 %v352, 0.03125
        %v354 = vsub.f32 %v347, %v353
        %v355 = vmul.f32 %v354, %v354
        %v356 = vsel %vm333, %v355, 0.0
        %357 = vadd.xlane.f32.xlu0 %v356
        %v358 = vpop.xlane.xlu0 %357
        %v359 = vmul.f32 %v358, 0.03125
        %v360 = vadd.f32 %v359, 1e-05
        %v361 = vrsqrt.pop %v360
        %v362 = vmul.f32 %v361, %v360
        %v363 = vmul.f32 %v362, %v361
        %v364 = vmul.f32 0.5, %v363
        %v365 = vsub.f32 1.5, %v364
        %v366 = vmul.f32 %v361, %v365
        %vm367 = vweird.f32 %v360
        %vm368 = vweird.f32 %v361
        %vm369 = vmor %vm367, %vm368
        %v370 = vsel %vm369, %v361, %v366
        %v371 = vmul.f32 %v354, %v370
        %v372 = vld [vmem:[%s3] sm:$0x1]
        %v374 = vperm.slane %v372, 0
        %v376 = vmul.f32 %v371, %v374
        %v377 = vld [vmem:[%s4] sm:$0x1]
        %v379 = vperm.slane %v377, 0
        %v381 = vadd.f32 %v376, %v379
        %v382 = vtanh.pop %v381
        %383 = vst.msk [vmem:[%s309] sm:$0xff] %vm333, %v382
        %s384 = sand.u32 %s164, 1
        %s385 = scalar_lea.sflag [#allocation4], %s384
        %s386 = sand.u32 %s164, 1
        %s387 = smul.addr %s386, 8
        %s388 = scalar_lea.vmem [#allocation8], %s387
        // Predicated region
        $region53: #{tpu_custom_call.1} parent=39 // pred_check
          %p389 = pneg %p174
        $region54: #{tpu_custom_call.1} parent=39 // pred_check_branch
          %391 = sbr.rel (%p389) target = $region56
        $region55: #{tpu_custom_call.1} parent=39 // pred_region
          %393 = vsyncadd %s385, 0
          %s394 = sadd.s32 %s30, %s29
          %s395 = smul.addr %s394, 8
          %s396 = scalar_lea.hbm %s5, %s395
          %s398 = sshll.u32 %s388, 4
          %s399 = int_to_ptr.vmem [resolvable:$true] %s398
          %s400 = sshll.u32 %s396, 4
          %s401 = int_to_ptr.hbm [resolvable:$true] %s400
          %403 = dma.vmem_to_hbm [thread:$0]  %s399, 128, %s401, %s385
        $region56: #{tpu_custom_call.1} parent=39 // pred_fallthru
          _
      $region40: #{tpu_custom_call.1} parent=5 // pred_fallthru
        _
      %p404 = scmp.le.s32.totalorder 2, %s20
      // Predicated region
      $region57: #{tpu_custom_call.1} parent=5 // pred_check
        %p405 = pneg %p404
      $region58: #{tpu_custom_call.1} parent=5 // pred_check_branch
        %407 = sbr.rel (%p405) target = $region60
      $region59: #{tpu_custom_call.1} parent=5 // pred_region
        %s408 = ssub.s32 %s20, 2
        // Predicated region
        $region61: #{tpu_custom_call.1} parent=59 // pred_check
          %p409 = pneg %p180
        $region62: #{tpu_custom_call.1} parent=59 // pred_check_branch
          %411 = sbr.rel (%p409) target = $region64
        $region63: #{tpu_custom_call.1} parent=59 // pred_region
          %s412 = sand.u32 %s165, 1
          %s413 = scalar_lea.sflag [#allocation4], %s412
          %s414 = sand.u32 %s165, 1
          %s415 = smul.addr %s414, 8
          %s416 = scalar_lea.vmem [#allocation8], %s415
          %418 = dma.done %s413, 128
        $region64: #{tpu_custom_call.1} parent=59 // pred_fallthru
          _
      $region60: #{tpu_custom_call.1} parent=5 // pred_fallthru
        _
    $region6: #{tpu_custom_call.1} parent=1 // loop_footer
      %s24 = sadd.s32 1, %s20
    $region7: #{tpu_custom_call.1} parent=1 // loop_footer_branch
      %19 = sbr.rel target = $region3
    $region8: #{tpu_custom_call.1} parent=1 // loop_exit
      _
    %419 = vsyncpa [#allocation3], 1
    %s420 = scalar_lea.sflag [#allocation3], 1
    %421 = vsyncpa %s420, 1
    %422 = vsyncpa [#allocation6], 1
    %s423 = scalar_lea.sflag [#allocation6], 1
    %424 = vsyncpa %s423, 1
    %425 = vsyncpa [#allocation4], 1
    %s426 = scalar_lea.sflag [#allocation4], 1
    %427 = vsyncpa %s426, 1

</llo_original>
